<compile_context>
chip_gen: v7x
topology: tpu7x:2x2x1
jax: 0.10.0
libtpu: 0.0.40
codegen_flags: <defaults>
</compile_context>

<pallas_src>
import functools

import jax
import jax.numpy as jnp
from jax.experimental import pallas as pl
from jax.experimental.pallas import tpu as pltpu


# --------------------------------------------------------------------------- #
# Kernels
# --------------------------------------------------------------------------- #
def _cca_single_pass_kernel(x_ref, w_ref, b_ref, o_ref, *, inv_hw):
    """Whole-HW resident slab: pool, fused gate linear + sigmoid, relu(attn*x).

    x_ref/o_ref: (tile_b, C, HW); w_ref: (C, C) fused weight (in x out); b_ref: (1, C).
    """
    x = x_ref[...]
    # Global average pool (lane reduce), always accumulated in f32.
    pooled = jnp.sum(x.astype(jnp.float32), axis=-1) * inv_hw            # (tb, C)
    z = jnp.dot(pooled, w_ref[...], preferred_element_type=jnp.float32) + b_ref[...]
    attn = jax.nn.sigmoid(z).astype(x.dtype)                             # (tb, C)
    o_ref[...] = jnp.maximum(attn[:, :, None] * x, 0.0).astype(o_ref.dtype)


def _cca_two_pass_kernel(x_ref, w_ref, b_ref, o_ref, acc_ref, attn_ref, *, inv_hw):
    """Fallback when the full-HW slab does not fit VMEM.

    Grid = (batch tiles, 2 phases, HW tiles).
    x_ref/o_ref: (tile_b, C, tile_hw); acc_ref: (tile_b, C, 1) f32 running spatial sum;
    attn_ref: (tile_b, C, 1) in the input dtype.
    """
    phase = pl.program_id(1)          # 0 = pool, 1 = apply
    j = pl.program_id(2)              # HW-tile index

    # ---- Phase 0: accumulate spatial sum (f32, keepdims -> no per-tile relayout). --
    @pl.when(phase == 0)
    def _pool():
        @pl.when(j == 0)
        def _init():
            acc_ref[...] = jnp.zeros_like(acc_ref)

        acc_ref[...] += jnp.sum(x_ref[...].astype(jnp.float32), axis=-1, keepdims=True)

    # ---- Phase 1, first HW tile: fused linear + sigmoid, once per batch tile. ----
    @pl.when(jnp.logical_and(phase == 1, j == 0))
    def _gates():
        pooled = acc_ref[...][:, :, 0] * inv_hw                           # (tb, C) f32
        z = jnp.dot(pooled, w_ref[...], preferred_element_type=jnp.float32) + b_ref[...]
        attn_ref[...] = jax.nn.sigmoid(z).astype(attn_ref.dtype)[:, :, None]

    # ---- Phase 1: relu(attn * x); lane-dense store. ----
    @pl.when(phase == 1)
    def _apply():
        o_ref[...] = jnp.maximum(attn_ref[...] * x_ref[...], 0.0).astype(o_ref.dtype)


# --------------------------------------------------------------------------- #
# Sizing helpers (generation-aware)
# --------------------------------------------------------------------------- #
def _vmem_capacity_bytes():
    """Physical VMEM per TensorCore; conservative 64 MiB (v7x) if unknown."""
    try:
        info = pltpu.get_tpu_info()
        cap = getattr(info, "vmem_capacity_bytes", None)
        if cap:
            return int(cap)
    except Exception:
        pass
    return 64 * 1024 * 1024


def _vmem_limit(phys_vmem, working_bytes):
    """Scoped-VMEM limit: 2x the working set, floored at 32 MiB, capped below physical."""
    ceiling = max(phys_vmem - (16 << 20), 32 << 20)
    want = max(32 << 20, 2 * int(working_bytes))
    return int(min(want, ceiling))


def _largest_divisor_leq(n, cap):
    cap = max(1, min(n, int(cap)))
    for d in range(cap, 0, -1):
        if n % d == 0:
            return d
    return 1


def _pick_tile_hw(hw, c, budget_bytes, itemsize):
    """Largest multiple-of-128 divisor of hw whose (1, C, tile) slab fits the budget."""
    best = 128
    for cand in range(128, hw + 1, 128):
        if hw % cand == 0 and c * cand * itemsize <= budget_bytes:
            best = cand
    return best


# --------------------------------------------------------------------------- #
# Wrapper
# --------------------------------------------------------------------------- #
def cross_channel_attention(x, skip_x, w_gate, b_gate, w_skip, b_skip,
                            *, _max_block_bytes=None):
    """x, skip_x: (B, C, H, W).  w_*: (C_out, C_in) like nn.Linear.weight, b_*: (C,)."""
    B, C, H, W = x.shape
    assert skip_x.shape == x.shape, "expand_as(skip_x) requires matching shape"
    assert w_gate.shape == (C, C) and w_skip.shape == (C, C), \
        "module is only well-formed when skip_channels == gate_channels == C"
    assert b_gate.shape == (C,) and b_skip.shape == (C,)

    HW = H * W
    itemsize = jnp.dtype(x.dtype).itemsize
    x3 = x.reshape(B, C, HW)

    # Algebraically fuse the two linears (valid because pooled_skip_x == pooled_x).
    w_comb = (0.5 * (w_gate + w_skip)).T.astype(jnp.float32)        # (C_in, C_out)
    b_comb = (0.5 * (b_gate + b_skip)).reshape(1, C).astype(jnp.float32)

    phys_vmem = _vmem_capacity_bytes()
    # Per-block budget: 4 live blocks (double-buffered in + out) must fit comfortably.
    # 128-MiB chips (v5e/v6e) -> 8 MiB blocks; v7x (64 MiB) -> ~5.3 MiB blocks.
    block_budget = min(8 << 20, phys_vmem // 12)
    if _max_block_bytes is not None:                 # test/override knob
        block_budget = max(512, min(block_budget, int(_max_block_bytes)))

    inv_hw = 1.0 / HW
    single_pass = C * HW * itemsize <= block_budget

    if single_pass:
        # ------------------- single HBM read of x: pool+gate+apply fused ----------
        per_b = C * HW * itemsize
        cap = min(B, max(1, block_budget // per_b))
        if B >= 2:
            cap = min(cap, B // 2)     # keep >= 2 batch tiles so v7x's 2nd core has work
        tile_b = _largest_divisor_leq(B, cap)
        n_b = B // tile_b
        block_bytes = tile_b * per_b
        extras = (C * C + 2 * C + 2 * tile_b * C) * 4 + (1 << 20)
        vmem_limit = _vmem_limit(phys_vmem, 4 * block_bytes + extras)

        kernel = functools.partial(_cca_single_pass_kernel, inv_hw=inv_hw)
        out3 = pl.pallas_call(
            kernel,
            out_shape=jax.ShapeDtypeStruct((B, C, HW), x.dtype),
            grid_spec=pltpu.PrefetchScalarGridSpec(
                num_scalar_prefetch=0,
                grid=(n_b,),
                in_specs=[
                    pl.BlockSpec((tile_b, C, HW), lambda i: (i, 0, 0)),   # x slab
                    pl.BlockSpec((C, C), lambda i: (0, 0)),               # fused W
                    pl.BlockSpec((1, C), lambda i: (0, 0)),               # fused b
                ],
                out_specs=pl.BlockSpec((tile_b, C, HW), lambda i: (i, 0, 0)),
            ),
            compiler_params=pltpu.CompilerParams(
                dimension_semantics=("parallel",),
                vmem_limit_bytes=vmem_limit,
            ),
            cost_estimate=pl.CostEstimate(
                flops=int(2 * B * C * C + 3 * B * C * HW),
                transcendentals=int(B * C),
                bytes_accessed=int(2 * B * C * HW * itemsize + (C * C + 2 * C) * 4),
            ),
        )(x3, w_comb, b_comb)
        return out3.reshape(B, C, H, W)

    # ----------------------- two-pass fallback (huge C*HW slabs) ------------------
    # Pad HW so a multiple-of-128 tile divides it. Padded zeros don't perturb the
    # spatial sum (we divide by the true HW) and the padding is sliced off the output.
    hw_pad = HW
    if HW % 128 != 0:
        hw_pad = ((HW + 1023) // 1024) * 1024
        x3 = jnp.pad(x3, ((0, 0), (0, 0), (0, hw_pad - HW)))

    tile_hw = _pick_tile_hw(hw_pad, C, block_budget, itemsize)
    per_b = C * tile_hw * itemsize
    cap = min(B, max(1, block_budget // per_b))
    if B >= 2:
        cap = min(cap, B // 2)          # v7x: keep the parallel batch axis >= 2 tiles
    tile_b = _largest_divisor_leq(B, cap)
    n_b = B // tile_b
    n_hw = hw_pad // tile_hw
    block_bytes = tile_b * per_b
    extras = (C * C + 2 * C + 4 * tile_b * C) * 4 + (1 << 20)
    vmem_limit = _vmem_limit(phys_vmem, 4 * block_bytes + extras)

    kernel = functools.partial(_cca_two_pass_kernel, inv_hw=inv_hw)
    out3 = pl.pallas_call(
        kernel,
        out_shape=jax.ShapeDtypeStruct((B, C, hw_pad), x.dtype),
        grid_spec=pltpu.PrefetchScalarGridSpec(
            num_scalar_prefetch=0,
            grid=(n_b, 2, n_hw),
            in_specs=[
                pl.BlockSpec((tile_b, C, tile_hw), lambda i, p, j: (i, 0, j)),  # x
                pl.BlockSpec((C, C), lambda i, p, j: (0, 0)),                   # fused W
                pl.BlockSpec((1, C), lambda i, p, j: (0, 0)),                   # fused b
            ],
            # During phase 0 (p == 0) every step maps to output block (i, 0, 0), so the
            # output buffer stays resident and is never written back while pooling; the
            # block is first stored at (p=1, j=0) before its index ever changes, so no
            # garbage ever reaches HBM. Phase 1 then walks (i, 0, j) normally.
            out_specs=pl.BlockSpec((tile_b, C, tile_hw), lambda i, p, j: (i, 0, j * p)),
            scratch_shapes=[
                pltpu.VMEM((tile_b, C, 1), jnp.float32),   # running spatial sum (f32)
                pltpu.VMEM((tile_b, C, 1), x.dtype),       # broadcast-ready attn
            ],
        ),
        compiler_params=pltpu.CompilerParams(
            dimension_semantics=("parallel", "arbitrary", "arbitrary"),
            vmem_limit_bytes=vmem_limit,
        ),
        cost_estimate=pl.CostEstimate(
            flops=int(2 * B * C * C + 3 * B * C * hw_pad),
            transcendentals=int(B * C),
            bytes_accessed=int(3 * B * C * hw_pad * itemsize + (C * C + 2 * C) * 4),
        ),
    )(x3, w_comb, b_comb)

    return out3[:, :, :HW].reshape(B, C, H, W)


# --------------------------------------------------------------------------- #
# Self-test
# --------------------------------------------------------------------------- #
if __name__ == "__main__":
    key = jax.random.PRNGKey(0)
    B, C, H, W = 2, 4, 16, 16              # skip_channels == gate_channels == C
    k1, k2, k3, k4, k5, k6 = jax.random.split(key, 6)

    x = jax.random.normal(k1, (B, C, H, W), jnp.float32)
    skip_x = jax.random.normal(k2, (B, C, H, W), jnp.float32)

    # Deterministic synthetic parameters (nn.Linear weight layout: (out, in)).
    w_gate = 0.1 * jax.random.normal(k3, (C, C), jnp.float32)
    b_gate = 0.1 * jax.random.normal(k4, (C,), jnp.float32)
    w_skip = 0.1 * jax.random.normal(k5, (C, C), jnp.float32)
    b_skip = 0.1 * jax.random.normal(k6, (C,), jnp.float32)

    # Plain-JAX reference (mirrors the PyTorch forward, including pooling x twice).
    pooled = x.mean(axis=(2, 3))
    g = pooled @ w_gate.T + b_gate
    s = pooled @ w_skip.T + b_skip
    attn = jax.nn.sigmoid((g + s) / 2.0)
    ref = jnp.maximum(attn[:, :, None, None] * x, 0.0)

    # Default path (single-pass resident slab; x read from HBM once).
    out = cross_channel_attention(x, skip_x, w_gate, b_gate, w_skip, b_skip)
    jax.block_until_ready(out)
    assert jnp.allclose(out, ref, atol=1e-5, rtol=1e-5), "single-pass mismatch"

    # Also exercise the tiled two-pass fallback (used when C*HW doesn't fit VMEM),
    # forcing tiny blocks so the grid is (2, 2, 2) and accumulation/phases are tested.
    out_tiled = cross_channel_attention(x, skip_x, w_gate, b_gate, w_skip, b_skip,
                                        _max_block_bytes=2048)
    jax.block_until_ready(out_tiled)
    assert jnp.allclose(out_tiled, ref, atol=1e-5, rtol=1e-5), "two-pass mismatch"

    print("KERNEL_OK")
</pallas_src>

<mosaic_0001>
module attributes {stable_mosaic.version = 11 : i64} {
  func.func @_cca_single_pass_kernel(%arg0: i32, %arg1: memref<1x4x256xf32, #tpu.memory_space<vmem>>, %arg2: memref<4x4xf32, #tpu.memory_space<vmem>>, %arg3: memref<1x4xf32, #tpu.memory_space<vmem>>, %arg4: memref<1x4x256xf32, #tpu.memory_space<vmem>>) attributes {dimension_semantics = [#tpu.dimension_semantics<parallel>], iteration_bounds = array<i64: 2>, scalar_prefetch = 0 : i64, scratch_operands = 0 : i64, tpu.core_type = #tpu.core_type<tc>, window_params = [{transform_indices = @transform_0, window_bounds = array<i64: 1, 4, 256>}, {pipeline_mode = #tpu.pipeline_mode<synchronous>, transform_indices = @transform_1, window_bounds = array<i64: 4, 4>}, {pipeline_mode = #tpu.pipeline_mode<synchronous>, transform_indices = @transform_2, window_bounds = array<i64: 1, 4>}, {transform_indices = @transform_3, window_bounds = array<i64: 1, 4, 256>}]} {
    %c0 = arith.constant 0 : index
    %c0_0 = arith.constant 0 : index
    %c0_1 = arith.constant 0 : index
    %0 = vector.load %arg1[%c0, %c0_0, %c0_1] : memref<1x4x256xf32, #tpu.memory_space<vmem>>, vector<1x4x256xf32>
    %cst = arith.constant dense<0.000000e+00> : vector<1x4xf32>
    %1 = vector.multi_reduction <add>, %0, %cst [2] : vector<1x4x256xf32> to vector<1x4xf32>
    %cst_2 = arith.constant 3.906250e-03 : f32
    %2 = vector.broadcast %cst_2 : f32 to vector<1x4xf32>
    %3 = arith.mulf %1, %2 : vector<1x4xf32>
    %c0_3 = arith.constant 0 : index
    %c0_4 = arith.constant 0 : index
    %4 = vector.load %arg2[%c0_3, %c0_4] : memref<4x4xf32, #tpu.memory_space<vmem>>, vector<4x4xf32>
    %cst_5 = arith.constant dense<0.000000e+00> : vector<1x4xf32>
    %5 = tpu.matmul %3, %4, %cst_5 {dimension_numbers = #tpu.dot_dimension_numbers<[1], [0], [0], [1], [0, 0, 1, 1], [], []>} : vector<1x4xf32>, vector<4x4xf32>, vector<1x4xf32> -> vector<1x4xf32>
    %c0_6 = arith.constant 0 : index
    %c0_7 = arith.constant 0 : index
    %6 = vector.load %arg3[%c0_6, %c0_7] : memref<1x4xf32, #tpu.memory_space<vmem>>, vector<1x4xf32>
    %7 = arith.addf %5, %6 : vector<1x4xf32>
    %8 = arith.negf %7 : vector<1x4xf32>
    %9 = math.exp %8 : vector<1x4xf32>
    %cst_8 = arith.constant 1.000000e+00 : f32
    %10 = vector.broadcast %cst_8 : f32 to vector<1x4xf32>
    %11 = arith.addf %10, %9 : vector<1x4xf32>
    %12 = arith.divf %10, %11 : vector<1x4xf32>
    %13 = vector.shape_cast %12 : vector<1x4xf32> to vector<1x4x1xf32>
    %14 = vector.broadcast %13 : vector<1x4x1xf32> to vector<1x4x256xf32>
    %15 = arith.mulf %14, %0 : vector<1x4x256xf32>
    %cst_9 = arith.constant 0.000000e+00 : f32
    %16 = vector.broadcast %cst_9 : f32 to vector<1x4x256xf32>
    %17 = arith.maximumf %15, %16 : vector<1x4x256xf32>
    %c0_10 = arith.constant 0 : index
    %c0_11 = arith.constant 0 : index
    %c0_12 = arith.constant 0 : index
    %18 = vector.load %arg4[%c0_10, %c0_11, %c0_12] : memref<1x4x256xf32, #tpu.memory_space<vmem>>, vector<1x4x256xf32>
    tpu.vector_store %arg4[%c0_10, %c0_11, %c0_12], %17 {strides = array<i32>} : memref<1x4x256xf32, #tpu.memory_space<vmem>>, vector<1x4x256xf32>,
    return
  }
  func.func @transform_0(%arg0: i32) -> (i32, i32, i32) {
    %c0_i32 = arith.constant 0 : i32
    %c0_i32_0 = arith.constant 0 : i32
    %c0_i32_1 = arith.constant 0 : i32
    return %arg0, %c0_i32, %c0_i32_0 : i32, i32, i32
  }
  func.func @transform_1(%arg0: i32) -> (i32, i32) {
    %c0_i32 = arith.constant 0 : i32
    %c0_i32_0 = arith.constant 0 : i32
    %c0_i32_1 = arith.constant 0 : i32
    return %c0_i32, %c0_i32_0 : i32, i32
  }
  func.func @transform_2(%arg0: i32) -> (i32, i32) {
    %c0_i32 = arith.constant 0 : i32
    %c0_i32_0 = arith.constant 0 : i32
    %c0_i32_1 = arith.constant 0 : i32
    return %c0_i32, %c0_i32_0 : i32, i32
  }
  func.func @transform_3(%arg0: i32) -> (i32, i32, i32) {
    %c0_i32 = arith.constant 0 : i32
    %c0_i32_0 = arith.constant 0 : i32
    %c0_i32_1 = arith.constant 0 : i32
    return %arg0, %c0_i32, %c0_i32_0 : i32, i32, i32
  }
}

</mosaic_0001>

<llo_original>
// kernel: tpu_custom_call.1
$region0: #{tpu_custom_call.1}
  #allocation0 [shape = 'u32[]', space=smem, size = 0x4, offset = 0x4, fixed_abs, tag = 'smem constant byte address 0x4 - core index']
  #allocation1 [shape = 'u32[144,128]{1,0:T(1,128)}', space=vmem, size = 0x12000, scoped, tag = 'internal scratch']
  %s0 = inlined_call_operand.hbm [shape: f32[2,4,256], index: 0, kind: input, shape index: {}]
  %s1 = inlined_call_operand.hbm [shape: f32[4,4], index: 1, kind: input, shape index: {}]
  %s2 = inlined_call_operand.vmem [shape: f32[1,4], index: 2, kind: input, shape index: {}]
  %s3 = inlined_call_operand.hbm [shape: f32[2,4,256], index: 3, kind: output, shape index: {}]
  %s4 = sld [smem:[#allocation0]]
  $region53: #{tpu_custom_call.1} parent=0
    _
  %s6 = ssub.s32 1, %s4
  %s7 = scalar_select 0, %s6, %s4
  $region1: #{tpu_custom_call.1} parent=0
    #allocation2 [shape = 'u8[8192]{0}', space=vmem, size = 0x2000, scoped, tag = 'input window, operand 0']
    #allocation3 [shape = 's32[2]{0}', space=sflag, size = 0x8, scoped, tag = 'scoped memory for tpu_custom_call.1']
    #allocation4 [shape = 's32[2]{0}', space=sflag, size = 0x8, scoped, tag = 'scoped memory for tpu_custom_call.1']
    #allocation5 [shape = 'u8[2048]{0}', space=vmem, size = 0x800, scoped, tag = 'input window, operand 1, single buffered']
    #allocation6 [shape = 's32[1]{0}', space=sflag, size = 0x4, scoped, tag = 'scoped memory for tpu_custom_call.1']
    #allocation7 [shape = 'u8[8192]{0}', space=vmem, size = 0x2000, scoped, tag = 'output window, operand 0']
    %8 = vsyncpa [#allocation3], 0
    %s9 = scalar_lea.sflag [#allocation3], 1
    %10 = vsyncpa %s9, 0
    %11 = vsyncpa [#allocation6], 0
    %12 = vsyncpa [#allocation4], 0
    %s13 = scalar_lea.sflag [#allocation4], 1
    %14 = vsyncpa %s13, 0
    loop: start=0, step=1, limit=4
    $region2: #{tpu_custom_call.1} parent=1 // loop_pre_header
      _
    $region3: #{tpu_custom_call.1} parent=1 // loop_header
      %s16 = sphi 0, %s20
      %p17 = scmp.ge.s32.totalorder %s16, 4
      %s26 = sphi 0, %s28
      %s29 = sphi 0, %s26
      %s30 = sphi 0, %s29
      %s46 = sphi 0, %s30
      %s50 = sphi 0, %s50
      %s52 = sphi 0, %s50
      %s53 = sphi 0, %s52
      %s67 = sphi 0, %s53
      %s71 = sphi 0, %s71
      %s73 = sphi 0, %s71
      %s74 = sphi 0, %s73
      %s88 = sphi 0, %s74
      %s94 = sphi 0, %s96
      %s97 = sphi 0, %s94
      %s98 = sphi 0, %s97
      %s114 = sphi 0, %s98
    $region4: #{tpu_custom_call.1} parent=1 // loop_header_branch
      %19 = sbr.rel (%p17) target = $region8
    $region5: #{tpu_custom_call.1} parent=1 // loop_body
      %s21 = ssub.s32 %s16, 1
      %s22 = ssub.s32 %s16, 2
      %s23 = sadd.s32 %s16, 1
      %s24 = ssub.s32 %s16, %s23
      %p25 = scmp.eq.s32.totalorder %s24, 0
      %s27 = sadd.s32 %s26, 1
      %s28 = scalar_select %p25, %s26, %s27
      %p31 = pneg %p25
      %p32 = scmp.eq.s32.totalorder %s16, 1
      %p33 = por %p31, %p32
      %p34 = scmp.ne.s32.totalorder %s26, %s29
      %p35 = scmp.eq.s32.totalorder %s16, 0
      %p36 = por %p34, %p35
      %p37 = scmp.ne.s32.totalorder %s26, %s29
      %p38 = scmp.eq.s32.totalorder %s21, 1
      %p39 = por %p37, %p38
      %p40 = scmp.ne.s32.totalorder %s29, %s30
      %p41 = scmp.eq.s32.totalorder %s21, 0
      %p42 = por %p40, %p41
      %p43 = scmp.ne.s32.totalorder %s29, %s30
      %p44 = scmp.eq.s32.totalorder %s22, 1
      %p45 = por %p43, %p44
      %p47 = scmp.ne.s32.totalorder %s30, %s46
      %p48 = scmp.eq.s32.totalorder %s22, 0
      %p49 = por %p47, %p48
      %s51 = sadd.s32 %s50, 1
      %p54 = scmp.eq.s32.totalorder %s16, 1
      %p55 = scmp.ne.s32.totalorder %s50, %s52
      %p56 = scmp.eq.s32.totalorder %s16, 0
      %p57 = por %p55, %p56
      %p58 = scmp.ne.s32.totalorder %s50, %s52
      %p59 = scmp.eq.s32.totalorder %s21, 1
      %p60 = por %p58, %p59
      %p61 = scmp.ne.s32.totalorder %s52, %s53
      %p62 = scmp.eq.s32.totalorder %s21, 0
      %p63 = por %p61, %p62
      %p64 = scmp.ne.s32.totalorder %s52, %s53
      %p65 = scmp.eq.s32.totalorder %s22, 1
      %p66 = por %p64, %p65
      %p68 = scmp.ne.s32.totalorder %s53, %s67
      %p69 = scmp.eq.s32.totalorder %s22, 0
      %p70 = por %p68, %p69
      %s72 = sadd.s32 %s71, 1
      %p75 = scmp.eq.s32.totalorder %s16, 1
      %p76 = scmp.ne.s32.totalorder %s71, %s73
      %p77 = scmp.eq.s32.totalorder %s16, 0
      %p78 = por %p76, %p77
      %p79 = scmp.ne.s32.totalorder %s71, %s73
      %p80 = scmp.eq.s32.totalorder %s21, 1
      %p81 = por %p79, %p80
      %p82 = scmp.ne.s32.totalorder %s73, %s74
      %p83 = scmp.eq.s32.totalorder %s21, 0
      %p84 = por %p82, %p83
      %p85 = scmp.ne.s32.totalorder %s73, %s74
      %p86 = scmp.eq.s32.totalorder %s22, 1
      %p87 = por %p85, %p86
      %p89 = scmp.ne.s32.totalorder %s74, %s88
      %p90 = scmp.eq.s32.totalorder %s22, 0
      %p91 = por %p89, %p90
      %s92 = ssub.s32 %s16, %s23
      %p93 = scmp.eq.s32.totalorder %s92, 0
      %s95 = sadd.s32 %s94, 1
      %s96 = scalar_select %p93, %s94, %s95
      %p99 = pneg %p93
      %p100 = scmp.eq.s32.totalorder %s16, 1
      %p101 = por %p99, %p100
      %p102 = scmp.ne.s32.totalorder %s94, %s97
      %p103 = scmp.eq.s32.totalorder %s16, 0
      %p104 = por %p102, %p103
      %p105 = scmp.ne.s32.totalorder %s94, %s97
      %p106 = scmp.eq.s32.totalorder %s21, 1
      %p107 = por %p105, %p106
      %p108 = scmp.ne.s32.totalorder %s97, %s98
      %p109 = scmp.eq.s32.totalorder %s21, 0
      %p110 = por %p108, %p109
      %p111 = scmp.ne.s32.totalorder %s97, %s98
      %p112 = scmp.eq.s32.totalorder %s22, 1
      %p113 = por %p111, %p112
      %p115 = scmp.ne.s32.totalorder %s98, %s114
      %p116 = scmp.eq.s32.totalorder %s22, 0
      %p117 = por %p115, %p116
      %p118 = scmp.le.s32.totalorder 1, %s16
      %p119 = scmp.lt.s32.totalorder %s16, 3
      %p120 = pnand %p118, %p119
      %p121 = pneg %p120
      // Predicated region
      $region9: #{tpu_custom_call.1} parent=5 // pred_check
        _
      $region10: #{tpu_custom_call.1} parent=5 // pred_check_branch
        %123 = sbr.rel (%p120) target = $region12
      $region11: #{tpu_custom_call.1} parent=5 // pred_region
        %s124 = ssub.s32 %s16, 1
        // Predicated region
        $region13: #{tpu_custom_call.1} parent=11 // pred_check
          %p125 = pneg %p63
        $region14: #{tpu_custom_call.1} parent=11 // pred_check_branch
          %127 = sbr.rel (%p125) target = $region16
        $region15: #{tpu_custom_call.1} parent=11 // pred_region
          %s129 = ssub.s32 64, 64
          %130 = vsyncadd [#allocation6], %s129
          %s132 = sshll.u32 [#allocation5], 4
          %s133 = int_to_ptr.vmem [resolvable:$true] %s132
          %135 = dma.hbm_to_vmem [thread:$0]  %s1, 64, %s133, [#allocation6]
        $region16: #{tpu_custom_call.1} parent=11 // pred_fallthru
          _
        // Predicated region
        $region17: #{tpu_custom_call.1} parent=11 // pred_check
          %p136 = pneg %p84
        $region18: #{tpu_custom_call.1} parent=11 // pred_check_branch
          %138 = sbr.rel (%p136) target = $region20
        $region19: #{tpu_custom_call.1} parent=11 // pred_region
          _
        $region20: #{tpu_custom_call.1} parent=11 // pred_fallthru
          _
      $region12: #{tpu_custom_call.1} parent=5 // pred_fallthru
        _
      %p139 = scmp.lt.s32.totalorder %s16, 2
      // Predicated region
      $region21: #{tpu_custom_call.1} parent=5 // pred_check
        %p140 = pneg %p139
      $region22: #{tpu_custom_call.1} parent=5 // pred_check_branch
        %142 = sbr.rel (%p140) target = $region24
      $region23: #{tpu_custom_call.1} parent=5 // pred_region
        // Predicated region
        $region25: #{tpu_custom_call.1} parent=23 // pred_check
          %p143 = pneg %p36
        $region26: #{tpu_custom_call.1} parent=23 // pred_check_branch
          %145 = sbr.rel (%p143) target = $region28
        $region27: #{tpu_custom_call.1} parent=23 // pred_region
          %s146 = sand.u32 %s26, 1
          %s147 = scalar_lea.sflag [#allocation3], %s146
          %s148 = sand.u32 %s26, 1
          %s149 = smul.addr %s148, 8
          %s150 = scalar_lea.vmem [#allocation2], %s149
          %s152 = ssub.s32 128, 128
          %153 = vsyncadd %s147, %s152
          %s154 = smul.addr %s16, 2
          %s155 = smul.addr %s154, 64
          %s156 = scalar_lea.hbm %s0, %s155
          %s158 = sshll.u32 %s150, 4
          %s159 = int_to_ptr.vmem [resolvable:$true] %s158
          %161 = dma.hbm_to_vmem [thread:$0]  %s156, 128, %s159, %s147
        $region28: #{tpu_custom_call.1} parent=23 // pred_fallthru
          _
      $region24: #{tpu_custom_call.1} parent=5 // pred_fallthru
        _
      %p162 = scmp.le.s32.totalorder 1, %s16
      %p163 = scmp.lt.s32.totalorder %s16, 3
      %p164 = pnand %p162, %p163
      %p165 = pneg %p164
      // Predicated region
      $region29: #{tpu_custom_call.1} parent=5 // pred_check
        _
      $region30: #{tpu_custom_call.1} parent=5 // pred_check_branch
        %167 = sbr.rel (%p164) target = $region32
      $region31: #{tpu_custom_call.1} parent=5 // pred_region
        %s168 = ssub.s32 %s16, 1
        %s169 = sand.u32 %s29, 1
        %s170 = scalar_lea.sflag [#allocation3], %s169
        %s171 = sand.u32 %s29, 1
        %s172 = smul.addr %s171, 8
        %s173 = scalar_lea.vmem [#allocation2], %s172
        // Predicated region
        $region33: #{tpu_custom_call.1} parent=31 // pred_check
          %p174 = pneg %p42
        $region34: #{tpu_custom_call.1} parent=31 // pred_check_branch
          %176 = sbr.rel (%p174) target = $region36
        $region35: #{tpu_custom_call.1} parent=31 // pred_region
          %177 = dma.done %s170, 128
        $region36: #{tpu_custom_call.1} parent=31 // pred_fallthru
          _
        // Predicated region
        $region37: #{tpu_custom_call.1} parent=31 // pred_check
          %p178 = pneg %p63
        $region38: #{tpu_custom_call.1} parent=31 // pred_check_branch
          %180 = sbr.rel (%p178) target = $region40
        $region39: #{tpu_custom_call.1} parent=31 // pred_region
          %181 = dma.done [#allocation6], 64
        $region40: #{tpu_custom_call.1} parent=31 // pred_fallthru
          _
        %s182 = sand.u32 %s29, 1
        %s183 = scalar_lea.sflag [#allocation3], %s182
        %s184 = sand.u32 %s29, 1
        %s185 = smul.addr %s184, 8
        %s186 = scalar_lea.vmem [#allocation2], %s185
        %p187 = pneg %p42
        %p188 = pneg %p39
        %p189 = pneg %p63
        %p190 = pneg %p60
        %p191 = pneg %p84
        %p192 = pneg %p81
        %p193 = pneg %p110
        %p194 = pneg %p107
        %s195 = sand.u32 %s97, 1
        %s196 = scalar_lea.sflag [#allocation4], %s195
        %s197 = sand.u32 %s97, 1
        %s198 = smul.addr %s197, 8
        %s199 = scalar_lea.vmem [#allocation7], %s198
        %v200 = vld [vmem:[%s173] sm:$0xff]
        %v202 = vcombine.high %v200, %v200
        %vm204 = vcmask 1043456
        %v205 = vsel %vm204, %v200, 0.0
        %v206 = vsel %vm204, %v202, 0.0
        %v207 = vadd.f32 %v205, %v206
        %208 = vadd.xlane.f32.xlu0 %v207
        %v209 = vpop.xlane.xlu0 %208
        %v210 = vmul.f32 %v209, 0.00390625
        %v211 = vld [vmem:[#allocation5] sm:$0xf]
        %v212 = vld [vmem:[%s2] sm:$0x1]
        %v214 = vlaneseq
        %v215 = vand.u32 %v214, 127
        %v216 = vlaneseq
        %v217 = vshrl.u32 %v216, 7
        %v218 = vsub.s32 %v215, %v217
        %v219 = vrot.slane %v210, %v218
        %vm220 = vcmask 31744
        %v221 = vsel %vm220, %v219, 0
        %v224 = vsel %vm204, %v211, 0
        %226 = vmatprep.subr.mxu0 0.0
        %227 = vmatpush1.msra.mxu0 %v224
        %228 = vmatprep.subr.mxu0 0.0
        %229 = vmatpush1.msra.mxu0 0.0
        %230 = vmatprep.subr.mxu0 0.0
        %231 = vmatpush1.msra.mxu0 0.0
        %232 = vmatprep.subr.mxu0 0.0
        %233 = vmatpush1.msra.mxu0 0.0
        %234 = vmatprep.subr.mxu0 0.0
        %235 = vmatpush1.msra.mxu0 0.0
        %236 = vmatprep.subr.mxu0 0.0
        %237 = vmatpush1.msra.mxu0 0.0
        %238 = vmatprep.subr.mxu0 0.0
        %239 = vmatpush1.msra.mxu0 0.0
        %240 = vmatprep.subr.mxu0 0.0
        %241 = vmatpush1.msra.mxu0 0.0
        %242 = vmatprep.subr.mxu0 0.0
        %243 = vmatpush1.msra.mxu0 0.0
        %244 = vmatprep.subr.mxu0 0.0
        %245 = vmatpush1.msra.mxu0 0.0
        %246 = vmatprep.subr.mxu0 0.0
        %247 = vmatpush1.msra.mxu0 0.0
        %248 = vmatprep.subr.mxu0 0.0
        %249 = vmatpush1.msra.mxu0 0.0
        %250 = vmatprep.subr.mxu0 0.0
        %251 = vmatpush1.msra.mxu0 0.0
        %252 = vmatprep.subr.mxu0 0.0
        %253 = vmatpush1.msra.mxu0 0.0
        %254 = vmatprep.subr.mxu0 0.0
        %255 = vmatpush1.msra.mxu0 0.0
        %256 = vmatprep.subr.mxu0 0.0
        %257 = vmatpush1.msra.mxu0 0.0
        %258 = vmatprep.subr.mxu0 0.0
        %259 = vmatpush1.msra.mxu0 0.0
        %260 = vmatprep.subr.mxu0 0.0
        %261 = vmatpush1.msra.mxu0 0.0
        %262 = vmatprep.subr.mxu0 0.0
        %263 = vmatpush1.msra.mxu0 0.0
        %264 = vmatprep.subr.mxu0 0.0
        %265 = vmatpush1.msra.mxu0 0.0
        %266 = vmatprep.subr.mxu0 0.0
        %267 = vmatpush1.msra.mxu0 0.0
        %268 = vmatprep.subr.mxu0 0.0
        %269 = vmatpush1.msra.mxu0 0.0
        %270 = vmatprep.subr.mxu0 0.0
        %271 = vmatpush1.msra.mxu0 0.0
        %272 = vmatprep.subr.mxu0 0.0
        %273 = vmatpush1.msra.mxu0 0.0
        %274 = vmatprep.subr.mxu0 0.0
        %275 = vmatpush1.msra.mxu0 0.0
        %276 = vmatprep.subr.mxu0 0.0
        %277 = vmatpush1.msra.mxu0 0.0
        %278 = vmatprep.subr.mxu0 0.0
        %279 = vmatpush1.msra.mxu0 0.0
        %280 = vmatprep.subr.mxu0 0.0
        %281 = vmatpush1.msra.mxu0 0.0
        %282 = vmatprep.subr.mxu0 0.0
        %283 = vmatpush1.msra.mxu0 0.0
        %284 = vmatprep.subr.mxu0 0.0
        %285 = vmatpush1.msra.mxu0 0.0
        %286 = vmatprep.subr.mxu0 0.0
        %287 = vmatpush1.msra.mxu0 0.0
        %288 = vmatprep.subr.mxu0 0.0
        %289 = vmatpush1.msra.mxu0 0.0
        %290 = vmatprep.mubr.f32.mxu0 0.0
        %291 = vmatmul.mubr.f32.gmra.mrb[0].mxu0 %v221
        %v292 = vpop.f32.mrb[0].mxu0
        %v293 = vadd.f32 %v212, %v292
        %v294 = vpop.f32.mrb[0].mxu0
        %295 = vdwg.mxu0
        %v296 = vxor.u32 %v293, 2147483648
        %v297 = vmul.f32 %v296, 1.442695
        %v298 = vpow.pop %v297
        %v299 = vadd.f32 %v298, 1.0
        %v300 = vrcp.pop %v299
        %v301 = vmul.f32 1.0, %v300
        %v302 = vlaneseq
        %v303 = vshrl.u32 %v302, 7
        %v304 = vsub.s32 0, %v303
        %v305 = vrot.slane %v301, %v304
        %307 = vbcast.lane.b32.xlu0 %v305, 256
        %v308 = vpop.permute.xlu0 %307
        %v309 = vmul.f32 %v308, %v200
        %v310 = vmul.f32 %v308, %v202
        %v311 = vmax.f32 %v309, 0.0
        %v312 = vmax.f32 %v310, 0.0
        %v315 = vcombine.low %v311, %v312
        %317 = vst [vmem:[%s199] sm:$0xff] %v315
        %s318 = sand.u32 %s97, 1
        %s319 = scalar_lea.sflag [#allocation4], %s318
        %s320 = sand.u32 %s97, 1
        %s321 = smul.addr %s320, 8
        %s322 = scalar_lea.vmem [#allocation7], %s321
        // Predicated region
        $region41: #{tpu_custom_call.1} parent=31 // pred_check
          %p323 = pneg %p107
        $region42: #{tpu_custom_call.1} parent=31 // pred_check_branch
          %325 = sbr.rel (%p323) target = $region44
        $region43: #{tpu_custom_call.1} parent=31 // pred_region
          %s327 = ssub.s32 128, 128
          %328 = vsyncadd %s319, %s327
          %s329 = smul.addr %s21, 2
          %s330 = smul.addr %s329, 64
          %s331 = scalar_lea.hbm %s3, %s330
          %s333 = sshll.u32 %s322, 4
          %s334 = int_to_ptr.vmem [resolvable:$true] %s333
          %336 = dma.vmem_to_hbm [thread:$0]  %s334, 128, %s331, %s319
        $region44: #{tpu_custom_call.1} parent=31 // pred_fallthru
          _
      $region32: #{tpu_custom_call.1} parent=5 // pred_fallthru
        _
      %p337 = scmp.le.s32.totalorder 2, %s16
      // Predicated region
      $region45: #{tpu_custom_call.1} parent=5 // pred_check
        %p338 = pneg %p337
      $region46: #{tpu_custom_call.1} parent=5 // pred_check_branch
        %340 = sbr.rel (%p338) target = $region48
      $region47: #{tpu_custom_call.1} parent=5 // pred_region
        %s341 = ssub.s32 %s16, 2
        // Predicated region
        $region49: #{tpu_custom_call.1} parent=47 // pred_check
          %p342 = pneg %p113
        $region50: #{tpu_custom_call.1} parent=47 // pred_check_branch
          %344 = sbr.rel (%p342) target = $region52
        $region51: #{tpu_custom_call.1} parent=47 // pred_region
          %s345 = sand.u32 %s98, 1
          %s346 = scalar_lea.sflag [#allocation4], %s345
          %s347 = sand.u32 %s98, 1
          %s348 = smul.addr %s347, 8
          %s349 = scalar_lea.vmem [#allocation7], %s348
          %350 = dma.done %s346, 128
        $region52: #{tpu_custom_call.1} parent=47 // pred_fallthru
          _
      $region48: #{tpu_custom_call.1} parent=5 // pred_fallthru
        _
    $region6: #{tpu_custom_call.1} parent=1 // loop_footer
      %s20 = sadd.s32 1, %s16
    $region7: #{tpu_custom_call.1} parent=1 // loop_footer_branch
      %15 = sbr.rel target = $region3
    $region8: #{tpu_custom_call.1} parent=1 // loop_exit
      _
    %351 = vsyncpa [#allocation3], 1
    %s352 = scalar_lea.sflag [#allocation3], 1
    %353 = vsyncpa %s352, 1
    %354 = vsyncpa [#allocation6], 1
    %355 = vsyncpa [#allocation4], 1
    %s356 = scalar_lea.sflag [#allocation4], 1
    %357 = vsyncpa %s356, 1

</llo_original>
